<compile_context>
chip_gen: v7x
topology: tpu7x:2x2x1
jax: 0.10.0
libtpu: 0.0.40
codegen_flags: <defaults>
</compile_context>

<pallas_src>
import functools

import numpy as np
import jax
import jax.numpy as jnp
from jax.experimental import pallas as pl
from jax.experimental.pallas import tpu as pltpu


# ----------------------------- in-kernel math ------------------------------

def _erf_approx(x):
    # Abramowitz & Stegun 7.1.26 polynomial, |abs err| < 1.5e-7.
    a1, a2, a3, a4, a5 = (0.254829592, -0.284496736, 1.421413741,
                          -1.453152027, 1.061405429)
    p = 0.3275911
    z = jnp.abs(x)
    t = 1.0 / (1.0 + p * z)
    poly = ((((a5 * t + a4) * t + a3) * t + a2) * t + a1) * t
    y = 1.0 - poly * jnp.exp(-z * z)            # exp -> EUP slot
    return jnp.where(x >= 0, y, -y)


def _gelu_exact(x):
    # torch.nn.GELU() default: 0.5 * x * (1 + erf(x / sqrt(2)))
    return 0.5 * x * (1.0 + _erf_approx(x * 0.7071067811865476))


def _resblock_kernel(x_ref, m_ref, w1_ref, sh1_ref, w2_ref, sh2_ref, o_ref,
                     *, taps, is_res, same_channels):
    # x_ref:   (1, Cin, L)    bf16; one batch chunk, channels-first, L = nb*H*W
    # m_ref:   (9, L)         f32 0/1 validity mask per 3x3 tap
    # w*_ref:  (Cout, 9*Cin)  bf16 conv weights, BN scale folded, tap-major K
    # sh*_ref: (Cout, 1)      f32 fused BatchNorm shift (conv bias folded)
    # o_ref:   (1, Cout, L)
    x = x_ref[0].astype(jnp.float32)            # (Cin, L)
    masks = m_ref[...]                          # (9, L)

    def im2col(h):                              # (C, L) f32 -> (9*C, L) bf16
        c, _ = h.shape
        cols = []
        for t, s in enumerate(taps):            # static unroll over 9 taps
            if s > 0:                           # shifted[:, p] = h[:, p + s]
                sh = jnp.concatenate(
                    [h[:, s:], jnp.zeros((c, s), h.dtype)], axis=1)
            elif s < 0:
                sh = jnp.concatenate(
                    [jnp.zeros((c, -s), h.dtype), h[:, :s]], axis=1)
            else:
                sh = h
            cols.append(sh * masks[t:t + 1, :])  # zero out-of-image taps
        return jnp.concatenate(cols, axis=0).astype(jnp.bfloat16)

    def conv_bn_gelu(h, w_ref, sh_ref):
        # Single fused MXU matmul per conv: (Cout, 9*Cin) @ (9*Cin, L) -> f32
        y = jnp.dot(w_ref[...], im2col(h),
                    preferred_element_type=jnp.float32)
        return _gelu_exact(y + sh_ref[...])      # BN shift + exact GELU in f32

    h1 = conv_bn_gelu(x, w1_ref, sh1_ref)
    h2 = conv_bn_gelu(h1, w2_ref, sh2_ref)

    if is_res:
        res = x if same_channels else h1
        out = (res + h2) * (1.0 / 1.414)
    else:
        out = h2
    o_ref[0] = out.astype(o_ref.dtype)


# ------------------------------ host-side glue ------------------------------

def _tap_shifts_and_masks(H, W, nb):
    """Static lane shifts (dy*W+dx) and per-tap validity masks tiled over nb images."""
    HW = H * W
    taps = []
    masks = np.zeros((9, HW), np.float32)
    t = 0
    for dy in (-1, 0, 1):
        for dx in (-1, 0, 1):
            taps.append(dy * W + dx)
            for y in range(H):
                for x in range(W):
                    if 0 <= y + dy < H and 0 <= x + dx < W:
                        masks[t, y * W + x] = 1.0
            t += 1
    masks = np.tile(masks, (1, nb))              # (9, nb*HW)
    return tuple(taps), jnp.asarray(masks)


def _fold_bn(w_oihw, bias, gamma, beta, mean, var, eps=1e-5):
    """Fold conv bias + eval-mode BatchNorm.

    Returns bf16 weights of shape (Cout, 9*Cin) with the BN scale folded in
    (K ordered tap-major: k = (ky*3+kx)*Cin + cin) and a channels-first
    (Cout, 1) f32 shift.
    """
    scale = gamma / jnp.sqrt(var + eps)                       # (Cout,)
    shift = beta + (bias - mean) * scale                      # (Cout,)
    cout, cin = w_oihw.shape[0], w_oihw.shape[1]
    w2d = jnp.transpose(w_oihw, (0, 2, 3, 1)).reshape(cout, 9 * cin)
    w2d = (w2d * scale[:, None]).astype(jnp.bfloat16)
    return w2d, shift.reshape(cout, 1).astype(jnp.float32)


def residual_conv_block(x_nchw, fused_params, *, is_res):
    N, Cin, H, W = x_nchw.shape
    HW = H * W
    w1, sh1, w2, sh2 = fused_params
    Cmid, Cout = w1.shape[0], w2.shape[0]
    same_channels = (Cin == Cout)

    # Fold images into the lane dimension until each grid step has >=512 lanes;
    # the remaining batch chunks form a "parallel" grid (v7x megacore).
    nb = 1
    while nb < N and nb * HW < 512 and N % (nb * 2) == 0:
        nb *= 2
    G = N // nb
    L = nb * HW

    taps, masks = _tap_shifts_and_masks(H, W, nb)

    # NCHW -> (G, C, L) channels-first, lane-dense; bf16 for the MXU / half DMA.
    x_blk = (x_nchw.reshape(G, nb, Cin, HW)
             .transpose(0, 2, 1, 3)
             .reshape(G, Cin, L)
             .astype(jnp.bfloat16))

    kernel = functools.partial(_resblock_kernel, taps=taps, is_res=is_res,
                               same_channels=same_channels)

    out_blk = pl.pallas_call(
        kernel,
        out_shape=jax.ShapeDtypeStruct((G, Cout, L), x_nchw.dtype),
        grid_spec=pltpu.PrefetchScalarGridSpec(
            num_scalar_prefetch=0,
            grid=(G,),
            in_specs=[
                pl.BlockSpec((1, Cin, L), lambda g: (g, 0, 0)),
                pl.BlockSpec((9, L), lambda g: (0, 0)),
                pl.BlockSpec((Cmid, 9 * Cin), lambda g: (0, 0)),
                pl.BlockSpec((Cmid, 1), lambda g: (0, 0)),
                pl.BlockSpec((Cout, 9 * Cmid), lambda g: (0, 0)),
                pl.BlockSpec((Cout, 1), lambda g: (0, 0)),
            ],
            out_specs=pl.BlockSpec((1, Cout, L), lambda g: (g, 0, 0)),
        ),
        compiler_params=pltpu.CompilerParams(
            dimension_semantics=("parallel",)),
    )(x_blk, masks, w1, sh1, w2, sh2)

    # (G, Cout, L) -> NCHW
    out = (out_blk.reshape(G, Cout, nb, HW)
           .transpose(0, 2, 1, 3)
           .reshape(N, Cout, H, W))
    return out


# -------------------------- deterministic parameters -------------------------

def init_params(key, in_channels, out_channels):
    ks = jax.random.split(key, 12)

    def conv_w(k, cout, cin):
        bound = 1.0 / np.sqrt(cin * 9)
        return jax.random.uniform(k, (cout, cin, 3, 3), jnp.float32, -bound, bound)

    def conv_b(k, cout, cin):
        bound = 1.0 / np.sqrt(cin * 9)
        return jax.random.uniform(k, (cout,), jnp.float32, -bound, bound)

    w1 = conv_w(ks[0], out_channels, in_channels)
    b1 = conv_b(ks[1], out_channels, in_channels)
    g1 = 1.0 + 0.1 * jax.random.normal(ks[2], (out_channels,), jnp.float32)
    be1 = 0.1 * jax.random.normal(ks[3], (out_channels,), jnp.float32)
    m1 = 0.1 * jax.random.normal(ks[4], (out_channels,), jnp.float32)
    v1 = 1.0 + 0.5 * jax.random.uniform(ks[5], (out_channels,), jnp.float32)

    w2 = conv_w(ks[6], out_channels, out_channels)
    b2 = conv_b(ks[7], out_channels, out_channels)
    g2 = 1.0 + 0.1 * jax.random.normal(ks[8], (out_channels,), jnp.float32)
    be2 = 0.1 * jax.random.normal(ks[9], (out_channels,), jnp.float32)
    m2 = 0.1 * jax.random.normal(ks[10], (out_channels,), jnp.float32)
    v2 = 1.0 + 0.5 * jax.random.uniform(ks[11], (out_channels,), jnp.float32)

    return (w1, b1, g1, be1, m1, v1, w2, b2, g2, be2, m2, v2)


# ------------------------------- pure-JAX reference --------------------------

def reference(x_nchw, raw, *, is_res, same_channels, eps=1e-5):
    (w1, b1, g1, be1, m1, v1, w2, b2, g2, be2, m2, v2) = raw

    def block(x, w, b, g, be, m, v):
        y = jax.lax.conv_general_dilated(
            x, w, (1, 1), ((1, 1), (1, 1)),
            dimension_numbers=("NCHW", "OIHW", "NCHW"),
            precision=jax.lax.Precision.HIGHEST)
        y = y + b[None, :, None, None]
        y = ((y - m[None, :, None, None]) /
             jnp.sqrt(v[None, :, None, None] + eps) * g[None, :, None, None]
             + be[None, :, None, None])
        return jax.nn.gelu(y, approximate=False)

    x1 = block(x_nchw, w1, b1, g1, be1, m1, v1)
    x2 = block(x1, w2, b2, g2, be2, m2, v2)
    if is_res:
        out = (x_nchw + x2) if same_channels else (x1 + x2)
        return out / 1.414
    return x2


# ------------------------------------ main -----------------------------------

if __name__ == "__main__":
    N, C, H, W = 2, 4, 16, 16
    IS_RES = True

    key = jax.random.PRNGKey(0)
    kx, kp = jax.random.split(key)
    x = jax.random.normal(kx, (N, C, H, W), jnp.float32)     # PyTorch NCHW input

    raw = init_params(kp, C, C)
    (w1, b1, g1, be1, m1, v1, w2, b2, g2, be2, m2, v2) = raw
    w1_f, sh1 = _fold_bn(w1, b1, g1, be1, m1, v1)
    w2_f, sh2 = _fold_bn(w2, b2, g2, be2, m2, v2)

    out = residual_conv_block(x, (w1_f, sh1, w2_f, sh2), is_res=IS_RES)
    out = jax.block_until_ready(out)

    ref = reference(x, raw, is_res=IS_RES, same_channels=True)
    assert out.shape == ref.shape == (N, C, H, W)
    # bf16 MXU inputs (activations + BN-folded weights) with f32 accumulation
    # -> compare against the f32 exact reference at ~1e-2 tolerance.
    if not np.allclose(np.asarray(out), np.asarray(ref), atol=2e-2, rtol=2e-2):
        raise AssertionError("Pallas kernel output mismatch vs JAX reference")

    print("KERNEL_OK")
</pallas_src>

<mosaic_0001>
module attributes {stable_mosaic.version = 11 : i64} {
  func.func @_resblock_kernel(%arg0: i32, %arg1: memref<1x4x512xbf16, #tpu.memory_space<vmem>>, %arg2: memref<9x512xf32, #tpu.memory_space<vmem>>, %arg3: memref<4x36xbf16, #tpu.memory_space<vmem>>, %arg4: memref<4x1xf32, #tpu.memory_space<vmem>>, %arg5: memref<4x36xbf16, #tpu.memory_space<vmem>>, %arg6: memref<4x1xf32, #tpu.memory_space<vmem>>, %arg7: memref<1x4x512xf32, #tpu.memory_space<vmem>>) attributes {dimension_semantics = [#tpu.dimension_semantics<parallel>], iteration_bounds = array<i64: 1>, scalar_prefetch = 0 : i64, scratch_operands = 0 : i64, tpu.core_type = #tpu.core_type<tc>, window_params = [{transform_indices = @transform_0, window_bounds = array<i64: 1, 4, 512>}, {pipeline_mode = #tpu.pipeline_mode<synchronous>, transform_indices = @transform_1, window_bounds = array<i64: 9, 512>}, {pipeline_mode = #tpu.pipeline_mode<synchronous>, transform_indices = @transform_2, window_bounds = array<i64: 4, 36>}, {pipeline_mode = #tpu.pipeline_mode<synchronous>, transform_indices = @transform_3, window_bounds = array<i64: 4, 1>}, {pipeline_mode = #tpu.pipeline_mode<synchronous>, transform_indices = @transform_4, window_bounds = array<i64: 4, 36>}, {pipeline_mode = #tpu.pipeline_mode<synchronous>, transform_indices = @transform_5, window_bounds = array<i64: 4, 1>}, {transform_indices = @transform_6, window_bounds = array<i64: 1, 4, 512>}]} {
    %c0 = arith.constant 0 : index
    %c0_0 = arith.constant 0 : index
    %c0_1 = arith.constant 0 : index
    %0 = vector.load %arg1[%c0, %c0_0, %c0_1] : memref<1x4x512xbf16, #tpu.memory_space<vmem>>, vector<1x4x512xbf16>
    %1 = vector.shape_cast %0 : vector<1x4x512xbf16> to vector<4x512xbf16>
    %2 = arith.extf %1 : vector<4x512xbf16> to vector<4x512xf32>
    %c0_2 = arith.constant 0 : index
    %c0_3 = arith.constant 0 : index
    %3 = vector.load %arg2[%c0_2, %c0_3] : memref<9x512xf32, #tpu.memory_space<vmem>>, vector<9x512xf32>
    %c0_4 = arith.constant 0 : index
    %c0_5 = arith.constant 0 : index
    %4 = vector.load %arg3[%c0_4, %c0_5] : memref<4x36xbf16, #tpu.memory_space<vmem>>, vector<4x36xbf16>
    %cst = arith.constant 0.000000e+00 : f32
    %5 = vector.broadcast %cst : f32 to vector<4x17xf32>
    %6 = vector.extract_strided_slice %2 {offsets = [0, 0], sizes = [4, 495], strides = [1, 1]} : vector<4x512xf32> to vector<4x495xf32>
    %7 = tpu.concatenate %5, %6 in 1 : vector<4x17xf32>, vector<4x495xf32> -> vector<4x512xf32>
    %8 = vector.extract_strided_slice %3 {offsets = [0, 0], sizes = [1, 512], strides = [1, 1]} : vector<9x512xf32> to vector<1x512xf32>
    %9 = vector.broadcast %8 : vector<1x512xf32> to vector<4x512xf32>
    %10 = arith.mulf %7, %9 : vector<4x512xf32>
    %cst_6 = arith.constant 0.000000e+00 : f32
    %11 = vector.broadcast %cst_6 : f32 to vector<4x16xf32>
    %12 = vector.extract_strided_slice %2 {offsets = [0, 0], sizes = [4, 496], strides = [1, 1]} : vector<4x512xf32> to vector<4x496xf32>
    %13 = tpu.concatenate %11, %12 in 1 : vector<4x16xf32>, vector<4x496xf32> -> vector<4x512xf32>
    %14 = vector.extract_strided_slice %3 {offsets = [1, 0], sizes = [1, 512], strides = [1, 1]} : vector<9x512xf32> to vector<1x512xf32>
    %15 = vector.broadcast %14 : vector<1x512xf32> to vector<4x512xf32>
    %16 = arith.mulf %13, %15 : vector<4x512xf32>
    %cst_7 = arith.constant 0.000000e+00 : f32
    %17 = vector.broadcast %cst_7 : f32 to vector<4x15xf32>
    %18 = vector.extract_strided_slice %2 {offsets = [0, 0], sizes = [4, 497], strides = [1, 1]} : vector<4x512xf32> to vector<4x497xf32>
    %19 = tpu.concatenate %17, %18 in 1 : vector<4x15xf32>, vector<4x497xf32> -> vector<4x512xf32>
    %20 = vector.extract_strided_slice %3 {offsets = [2, 0], sizes = [1, 512], strides = [1, 1]} : vector<9x512xf32> to vector<1x512xf32>
    %21 = vector.broadcast %20 : vector<1x512xf32> to vector<4x512xf32>
    %22 = arith.mulf %19, %21 : vector<4x512xf32>
    %cst_8 = arith.constant 0.000000e+00 : f32
    %23 = vector.broadcast %cst_8 : f32 to vector<4x1xf32>
    %24 = vector.extract_strided_slice %2 {offsets = [0, 0], sizes = [4, 511], strides = [1, 1]} : vector<4x512xf32> to vector<4x511xf32>
    %25 = tpu.concatenate %23, %24 in 1 : vector<4x1xf32>, vector<4x511xf32> -> vector<4x512xf32>
    %26 = vector.extract_strided_slice %3 {offsets = [3, 0], sizes = [1, 512], strides = [1, 1]} : vector<9x512xf32> to vector<1x512xf32>
    %27 = vector.broadcast %26 : vector<1x512xf32> to vector<4x512xf32>
    %28 = arith.mulf %25, %27 : vector<4x512xf32>
    %29 = vector.extract_strided_slice %3 {offsets = [4, 0], sizes = [1, 512], strides = [1, 1]} : vector<9x512xf32> to vector<1x512xf32>
    %30 = vector.broadcast %29 : vector<1x512xf32> to vector<4x512xf32>
    %31 = arith.mulf %2, %30 : vector<4x512xf32>
    %32 = vector.extract_strided_slice %2 {offsets = [0, 1], sizes = [4, 511], strides = [1, 1]} : vector<4x512xf32> to vector<4x511xf32>
    %cst_9 = arith.constant 0.000000e+00 : f32
    %33 = vector.broadcast %cst_9 : f32 to vector<4x1xf32>
    %34 = tpu.concatenate %32, %33 in 1 : vector<4x511xf32>, vector<4x1xf32> -> vector<4x512xf32>
    %35 = vector.extract_strided_slice %3 {offsets = [5, 0], sizes = [1, 512], strides = [1, 1]} : vector<9x512xf32> to vector<1x512xf32>
    %36 = vector.broadcast %35 : vector<1x512xf32> to vector<4x512xf32>
    %37 = arith.mulf %34, %36 : vector<4x512xf32>
    %38 = vector.extract_strided_slice %2 {offsets = [0, 15], sizes = [4, 497], strides = [1, 1]} : vector<4x512xf32> to vector<4x497xf32>
    %cst_10 = arith.constant 0.000000e+00 : f32
    %39 = vector.broadcast %cst_10 : f32 to vector<4x15xf32>
    %40 = tpu.concatenate %38, %39 in 1 : vector<4x497xf32>, vector<4x15xf32> -> vector<4x512xf32>
    %41 = vector.extract_strided_slice %3 {offsets = [6, 0], sizes = [1, 512], strides = [1, 1]} : vector<9x512xf32> to vector<1x512xf32>
    %42 = vector.broadcast %41 : vector<1x512xf32> to vector<4x512xf32>
    %43 = arith.mulf %40, %42 : vector<4x512xf32>
    %44 = vector.extract_strided_slice %2 {offsets = [0, 16], sizes = [4, 496], strides = [1, 1]} : vector<4x512xf32> to vector<4x496xf32>
    %cst_11 = arith.constant 0.000000e+00 : f32
    %45 = vector.broadcast %cst_11 : f32 to vector<4x16xf32>
    %46 = tpu.concatenate %44, %45 in 1 : vector<4x496xf32>, vector<4x16xf32> -> vector<4x512xf32>
    %47 = vector.extract_strided_slice %3 {offsets = [7, 0], sizes = [1, 512], strides = [1, 1]} : vector<9x512xf32> to vector<1x512xf32>
    %48 = vector.broadcast %47 : vector<1x512xf32> to vector<4x512xf32>
    %49 = arith.mulf %46, %48 : vector<4x512xf32>
    %50 = vector.extract_strided_slice %2 {offsets = [0, 17], sizes = [4, 495], strides = [1, 1]} : vector<4x512xf32> to vector<4x495xf32>
    %cst_12 = arith.constant 0.000000e+00 : f32
    %51 = vector.broadcast %cst_12 : f32 to vector<4x17xf32>
    %52 = tpu.concatenate %50, %51 in 1 : vector<4x495xf32>, vector<4x17xf32> -> vector<4x512xf32>
    %53 = vector.extract_strided_slice %3 {offsets = [8, 0], sizes = [1, 512], strides = [1, 1]} : vector<9x512xf32> to vector<1x512xf32>
    %54 = vector.broadcast %53 : vector<1x512xf32> to vector<4x512xf32>
    %55 = arith.mulf %52, %54 : vector<4x512xf32>
    %56 = tpu.concatenate %10, %16, %22, %28, %31, %37, %43, %49, %55 in 0 : vector<4x512xf32>, vector<4x512xf32>, vector<4x512xf32>, vector<4x512xf32>, vector<4x512xf32>, vector<4x512xf32>, vector<4x512xf32>, vector<4x512xf32>, vector<4x512xf32> -> vector<36x512xf32>
    %57 = arith.truncf %56 : vector<36x512xf32> to vector<36x512xbf16>
    %cst_13 = arith.constant dense<0.000000e+00> : vector<4x512xf32>
    %58 = tpu.matmul %4, %57, %cst_13 {dimension_numbers = #tpu.dot_dimension_numbers<[1], [0], [0], [1], [0, 0, 1, 1], [], []>} : vector<4x36xbf16>, vector<36x512xbf16>, vector<4x512xf32> -> vector<4x512xf32>
    %c0_14 = arith.constant 0 : index
    %c0_15 = arith.constant 0 : index
    %59 = vector.load %arg4[%c0_14, %c0_15] : memref<4x1xf32, #tpu.memory_space<vmem>>, vector<4x1xf32>
    %60 = vector.broadcast %59 : vector<4x1xf32> to vector<4x512xf32>
    %61 = arith.addf %58, %60 : vector<4x512xf32>
    %cst_16 = arith.constant 5.000000e-01 : f32
    %62 = vector.broadcast %cst_16 : f32 to vector<4x512xf32>
    %63 = arith.mulf %62, %61 : vector<4x512xf32>
    %cst_17 = arith.constant 0.707106769 : f32
    %64 = vector.broadcast %cst_17 : f32 to vector<4x512xf32>
    %65 = arith.mulf %61, %64 : vector<4x512xf32>
    %66 = math.absf %65 : vector<4x512xf32>
    %cst_18 = arith.constant 0.327591091 : f32
    %67 = vector.broadcast %cst_18 : f32 to vector<4x512xf32>
    %68 = arith.mulf %67, %66 : vector<4x512xf32>
    %cst_19 = arith.constant 1.000000e+00 : f32
    %69 = vector.broadcast %cst_19 : f32 to vector<4x512xf32>
    %70 = arith.addf %69, %68 : vector<4x512xf32>
    %cst_20 = arith.constant 1.000000e+00 : f32
    %71 = vector.broadcast %cst_20 : f32 to vector<4x512xf32>
    %72 = arith.divf %71, %70 : vector<4x512xf32>
    %cst_21 = arith.constant 1.06140542 : f32
    %73 = vector.broadcast %cst_21 : f32 to vector<4x512xf32>
    %74 = arith.mulf %73, %72 : vector<4x512xf32>
    %cst_22 = arith.constant -1.45315206 : f32
    %75 = vector.broadcast %cst_22 : f32 to vector<4x512xf32>
    %76 = arith.addf %74, %75 : vector<4x512xf32>
    %77 = arith.mulf %76, %72 : vector<4x512xf32>
    %cst_23 = arith.constant 1.42141378 : f32
    %78 = vector.broadcast %cst_23 : f32 to vector<4x512xf32>
    %79 = arith.addf %77, %78 : vector<4x512xf32>
    %80 = arith.mulf %79, %72 : vector<4x512xf32>
    %cst_24 = arith.constant -0.284496725 : f32
    %81 = vector.broadcast %cst_24 : f32 to vector<4x512xf32>
    %82 = arith.addf %80, %81 : vector<4x512xf32>
    %83 = arith.mulf %82, %72 : vector<4x512xf32>
    %cst_25 = arith.constant 0.254829586 : f32
    %84 = vector.broadcast %cst_25 : f32 to vector<4x512xf32>
    %85 = arith.addf %83, %84 : vector<4x512xf32>
    %86 = arith.mulf %85, %72 : vector<4x512xf32>
    %cst_26 = arith.constant 0.000000e+00 : f32
    %87 = vector.broadcast %cst_26 : f32 to vector<4x512xf32>
    %88 = arith.subf %87, %66 : vector<4x512xf32>
    %89 = arith.mulf %88, %66 : vector<4x512xf32>
    %90 = math.exp %89 : vector<4x512xf32>
    %91 = arith.mulf %86, %90 : vector<4x512xf32>
    %cst_27 = arith.constant 1.000000e+00 : f32
    %92 = vector.broadcast %cst_27 : f32 to vector<4x512xf32>
    %93 = arith.subf %92, %91 : vector<4x512xf32>
    %cst_28 = arith.constant 0.000000e+00 : f32
    %94 = vector.broadcast %cst_28 : f32 to vector<4x512xf32>
    %95 = arith.cmpf oge, %65, %94 : vector<4x512xf32>
    %cst_29 = arith.constant 0.000000e+00 : f32
    %96 = vector.broadcast %cst_29 : f32 to vector<4x512xf32>
    %97 = arith.subf %96, %93 : vector<4x512xf32>
    %98 = arith.select %95, %93, %97 : vector<4x512xi1>, vector<4x512xf32>
    %cst_30 = arith.constant 1.000000e+00 : f32
    %99 = vector.broadcast %cst_30 : f32 to vector<4x512xf32>
    %100 = arith.addf %99, %98 : vector<4x512xf32>
    %101 = arith.mulf %63, %100 : vector<4x512xf32>
    %c0_31 = arith.constant 0 : index
    %c0_32 = arith.constant 0 : index
    %102 = vector.load %arg5[%c0_31, %c0_32] : memref<4x36xbf16, #tpu.memory_space<vmem>>, vector<4x36xbf16>
    %cst_33 = arith.constant 0.000000e+00 : f32
    %103 = vector.broadcast %cst_33 : f32 to vector<4x17xf32>
    %104 = vector.extract_strided_slice %101 {offsets = [0, 0], sizes = [4, 495], strides = [1, 1]} : vector<4x512xf32> to vector<4x495xf32>
    %105 = tpu.concatenate %103, %104 in 1 : vector<4x17xf32>, vector<4x495xf32> -> vector<4x512xf32>
    %106 = vector.extract_strided_slice %3 {offsets = [0, 0], sizes = [1, 512], strides = [1, 1]} : vector<9x512xf32> to vector<1x512xf32>
    %107 = vector.broadcast %106 : vector<1x512xf32> to vector<4x512xf32>
    %108 = arith.mulf %105, %107 : vector<4x512xf32>
    %cst_34 = arith.constant 0.000000e+00 : f32
    %109 = vector.broadcast %cst_34 : f32 to vector<4x16xf32>
    %110 = vector.extract_strided_slice %101 {offsets = [0, 0], sizes = [4, 496], strides = [1, 1]} : vector<4x512xf32> to vector<4x496xf32>
    %111 = tpu.concatenate %109, %110 in 1 : vector<4x16xf32>, vector<4x496xf32> -> vector<4x512xf32>
    %112 = vector.extract_strided_slice %3 {offsets = [1, 0], sizes = [1, 512], strides = [1, 1]} : vector<9x512xf32> to vector<1x512xf32>
    %113 = vector.broadcast %112 : vector<1x512xf32> to vector<4x512xf32>
    %114 = arith.mulf %111, %113 : vector<4x512xf32>
    %cst_35 = arith.constant 0.000000e+00 : f32
    %115 = vector.broadcast %cst_35 : f32 to vector<4x15xf32>
    %116 = vector.extract_strided_slice %101 {offsets = [0, 0], sizes = [4, 497], strides = [1, 1]} : vector<4x512xf32> to vector<4x497xf32>
    %117 = tpu.concatenate %115, %116 in 1 : vector<4x15xf32>, vector<4x497xf32> -> vector<4x512xf32>
    %118 = vector.extract_strided_slice %3 {offsets = [2, 0], sizes = [1, 512], strides = [1, 1]} : vector<9x512xf32> to vector<1x512xf32>
    %119 = vector.broadcast %118 : vector<1x512xf32> to vector<4x512xf32>
    %120 = arith.mulf %117, %119 : vector<4x512xf32>
    %cst_36 = arith.constant 0.000000e+00 : f32
    %121 = vector.broadcast %cst_36 : f32 to vector<4x1xf32>
    %122 = vector.extract_strided_slice %101 {offsets = [0, 0], sizes = [4, 511], strides = [1, 1]} : vector<4x512xf32> to vector<4x511xf32>
    %123 = tpu.concatenate %121, %122 in 1 : vector<4x1xf32>, vector<4x511xf32> -> vector<4x512xf32>
    %124 = vector.extract_strided_slice %3 {offsets = [3, 0], sizes = [1, 512], strides = [1, 1]} : vector<9x512xf32> to vector<1x512xf32>
    %125 = vector.broadcast %124 : vector<1x512xf32> to vector<4x512xf32>
    %126 = arith.mulf %123, %125 : vector<4x512xf32>
    %127 = vector.extract_strided_slice %3 {offsets = [4, 0], sizes = [1, 512], strides = [1, 1]} : vector<9x512xf32> to vector<1x512xf32>
    %128 = vector.broadcast %127 : vector<1x512xf32> to vector<4x512xf32>
    %129 = arith.mulf %101, %128 : vector<4x512xf32>
    %130 = vector.extract_strided_slice %101 {offsets = [0, 1], sizes = [4, 511], strides = [1, 1]} : vector<4x512xf32> to vector<4x511xf32>
    %cst_37 = arith.constant 0.000000e+00 : f32
    %131 = vector.broadcast %cst_37 : f32 to vector<4x1xf32>
    %132 = tpu.concatenate %130, %131 in 1 : vector<4x511xf32>, vector<4x1xf32> -> vector<4x512xf32>
    %133 = vector.extract_strided_slice %3 {offsets = [5, 0], sizes = [1, 512], strides = [1, 1]} : vector<9x512xf32> to vector<1x512xf32>
    %134 = vector.broadcast %133 : vector<1x512xf32> to vector<4x512xf32>
    %135 = arith.mulf %132, %134 : vector<4x512xf32>
    %136 = vector.extract_strided_slice %101 {offsets = [0, 15], sizes = [4, 497], strides = [1, 1]} : vector<4x512xf32> to vector<4x497xf32>
    %cst_38 = arith.constant 0.000000e+00 : f32
    %137 = vector.broadcast %cst_38 : f32 to vector<4x15xf32>
    %138 = tpu.concatenate %136, %137 in 1 : vector<4x497xf32>, vector<4x15xf32> -> vector<4x512xf32>
    %139 = vector.extract_strided_slice %3 {offsets = [6, 0], sizes = [1, 512], strides = [1, 1]} : vector<9x512xf32> to vector<1x512xf32>
    %140 = vector.broadcast %139 : vector<1x512xf32> to vector<4x512xf32>
    %141 = arith.mulf %138, %140 : vector<4x512xf32>
    %142 = vector.extract_strided_slice %101 {offsets = [0, 16], sizes = [4, 496], strides = [1, 1]} : vector<4x512xf32> to vector<4x496xf32>
    %cst_39 = arith.constant 0.000000e+00 : f32
    %143 = vector.broadcast %cst_39 : f32 to vector<4x16xf32>
    %144 = tpu.concatenate %142, %143 in 1 : vector<4x496xf32>, vector<4x16xf32> -> vector<4x512xf32>
    %145 = vector.extract_strided_slice %3 {offsets = [7, 0], sizes = [1, 512], strides = [1, 1]} : vector<9x512xf32> to vector<1x512xf32>
    %146 = vector.broadcast %145 : vector<1x512xf32> to vector<4x512xf32>
    %147 = arith.mulf %144, %146 : vector<4x512xf32>
    %148 = vector.extract_strided_slice %101 {offsets = [0, 17], sizes = [4, 495], strides = [1, 1]} : vector<4x512xf32> to vector<4x495xf32>
    %cst_40 = arith.constant 0.000000e+00 : f32
    %149 = vector.broadcast %cst_40 : f32 to vector<4x17xf32>
    %150 = tpu.concatenate %148, %149 in 1 : vector<4x495xf32>, vector<4x17xf32> -> vector<4x512xf32>
    %151 = vector.extract_strided_slice %3 {offsets = [8, 0], sizes = [1, 512], strides = [1, 1]} : vector<9x512xf32> to vector<1x512xf32>
    %152 = vector.broadcast %151 : vector<1x512xf32> to vector<4x512xf32>
    %153 = arith.mulf %150, %152 : vector<4x512xf32>
    %154 = tpu.concatenate %108, %114, %120, %126, %129, %135, %141, %147, %153 in 0 : vector<4x512xf32>, vector<4x512xf32>, vector<4x512xf32>, vector<4x512xf32>, vector<4x512xf32>, vector<4x512xf32>, vector<4x512xf32>, vector<4x512xf32>, vector<4x512xf32> -> vector<36x512xf32>
    %155 = arith.truncf %154 : vector<36x512xf32> to vector<36x512xbf16>
    %cst_41 = arith.constant dense<0.000000e+00> : vector<4x512xf32>
    %156 = tpu.matmul %102, %155, %cst_41 {dimension_numbers = #tpu.dot_dimension_numbers<[1], [0], [0], [1], [0, 0, 1, 1], [], []>} : vector<4x36xbf16>, vector<36x512xbf16>, vector<4x512xf32> -> vector<4x512xf32>
    %c0_42 = arith.constant 0 : index
    %c0_43 = arith.constant 0 : index
    %157 = vector.load %arg6[%c0_42, %c0_43] : memref<4x1xf32, #tpu.memory_space<vmem>>, vector<4x1xf32>
    %158 = vector.broadcast %157 : vector<4x1xf32> to vector<4x512xf32>
    %159 = arith.addf %156, %158 : vector<4x512xf32>
    %cst_44 = arith.constant 5.000000e-01 : f32
    %160 = vector.broadcast %cst_44 : f32 to vector<4x512xf32>
    %161 = arith.mulf %160, %159 : vector<4x512xf32>
    %cst_45 = arith.constant 0.707106769 : f32
    %162 = vector.broadcast %cst_45 : f32 to vector<4x512xf32>
    %163 = arith.mulf %159, %162 : vector<4x512xf32>
    %164 = math.absf %163 : vector<4x512xf32>
    %cst_46 = arith.constant 0.327591091 : f32
    %165 = vector.broadcast %cst_46 : f32 to vector<4x512xf32>
    %166 = arith.mulf %165, %164 : vector<4x512xf32>
    %cst_47 = arith.constant 1.000000e+00 : f32
    %167 = vector.broadcast %cst_47 : f32 to vector<4x512xf32>
    %168 = arith.addf %167, %166 : vector<4x512xf32>
    %cst_48 = arith.constant 1.000000e+00 : f32
    %169 = vector.broadcast %cst_48 : f32 to vector<4x512xf32>
    %170 = arith.divf %169, %168 : vector<4x512xf32>
    %cst_49 = arith.constant 1.06140542 : f32
    %171 = vector.broadcast %cst_49 : f32 to vector<4x512xf32>
    %172 = arith.mulf %171, %170 : vector<4x512xf32>
    %cst_50 = arith.constant -1.45315206 : f32
    %173 = vector.broadcast %cst_50 : f32 to vector<4x512xf32>
    %174 = arith.addf %172, %173 : vector<4x512xf32>
    %175 = arith.mulf %174, %170 : vector<4x512xf32>
    %cst_51 = arith.constant 1.42141378 : f32
    %176 = vector.broadcast %cst_51 : f32 to vector<4x512xf32>
    %177 = arith.addf %175, %176 : vector<4x512xf32>
    %178 = arith.mulf %177, %170 : vector<4x512xf32>
    %cst_52 = arith.constant -0.284496725 : f32
    %179 = vector.broadcast %cst_52 : f32 to vector<4x512xf32>
    %180 = arith.addf %178, %179 : vector<4x512xf32>
    %181 = arith.mulf %180, %170 : vector<4x512xf32>
    %cst_53 = arith.constant 0.254829586 : f32
    %182 = vector.broadcast %cst_53 : f32 to vector<4x512xf32>
    %183 = arith.addf %181, %182 : vector<4x512xf32>
    %184 = arith.mulf %183, %170 : vector<4x512xf32>
    %cst_54 = arith.constant 0.000000e+00 : f32
    %185 = vector.broadcast %cst_54 : f32 to vector<4x512xf32>
    %186 = arith.subf %185, %164 : vector<4x512xf32>
    %187 = arith.mulf %186, %164 : vector<4x512xf32>
    %188 = math.exp %187 : vector<4x512xf32>
    %189 = arith.mulf %184, %188 : vector<4x512xf32>
    %cst_55 = arith.constant 1.000000e+00 : f32
    %190 = vector.broadcast %cst_55 : f32 to vector<4x512xf32>
    %191 = arith.subf %190, %189 : vector<4x512xf32>
    %cst_56 = arith.constant 0.000000e+00 : f32
    %192 = vector.broadcast %cst_56 : f32 to vector<4x512xf32>
    %193 = arith.cmpf oge, %163, %192 : vector<4x512xf32>
    %cst_57 = arith.constant 0.000000e+00 : f32
    %194 = vector.broadcast %cst_57 : f32 to vector<4x512xf32>
    %195 = arith.subf %194, %191 : vector<4x512xf32>
    %196 = arith.select %193, %191, %195 : vector<4x512xi1>, vector<4x512xf32>
    %cst_58 = arith.constant 1.000000e+00 : f32
    %197 = vector.broadcast %cst_58 : f32 to vector<4x512xf32>
    %198 = arith.addf %197, %196 : vector<4x512xf32>
    %199 = arith.mulf %161, %198 : vector<4x512xf32>
    %200 = arith.addf %2, %199 : vector<4x512xf32>
    %cst_59 = arith.constant 0.70721358 : f32
    %201 = vector.broadcast %cst_59 : f32 to vector<4x512xf32>
    %202 = arith.mulf %200, %201 : vector<4x512xf32>
    %c0_60 = arith.constant 0 : index
    %c0_61 = arith.constant 0 : index
    %c0_62 = arith.constant 0 : index
    %203 = vector.load %arg7[%c0_60, %c0_61, %c0_62] : memref<1x4x512xf32, #tpu.memory_space<vmem>>, vector<1x4x512xf32>
    %204 = vector.shape_cast %203 : vector<1x4x512xf32> to vector<4x512xf32>
    %205 = vector.shape_cast %202 : vector<4x512xf32> to vector<1x4x512xf32>
    tpu.vector_store %arg7[%c0_60, %c0_61, %c0_62], %205 {strides = array<i32>} : memref<1x4x512xf32, #tpu.memory_space<vmem>>, vector<1x4x512xf32>,
    return
  }
  func.func @transform_0(%arg0: i32) -> (i32, i32, i32) {
    %c0_i32 = arith.constant 0 : i32
    %c0_i32_0 = arith.constant 0 : i32
    %c0_i32_1 = arith.constant 0 : i32
    return %arg0, %c0_i32, %c0_i32_0 : i32, i32, i32
  }
  func.func @transform_1(%arg0: i32) -> (i32, i32) {
    %c0_i32 = arith.constant 0 : i32
    %c0_i32_0 = arith.constant 0 : i32
    %c0_i32_1 = arith.constant 0 : i32
    return %c0_i32, %c0_i32_0 : i32, i32
  }
  func.func @transform_2(%arg0: i32) -> (i32, i32) {
    %c0_i32 = arith.constant 0 : i32
    %c0_i32_0 = arith.constant 0 : i32
    %c0_i32_1 = arith.constant 0 : i32
    return %c0_i32, %c0_i32_0 : i32, i32
  }
  func.func @transform_3(%arg0: i32) -> (i32, i32) {
    %c0_i32 = arith.constant 0 : i32
    %c0_i32_0 = arith.constant 0 : i32
    %c0_i32_1 = arith.constant 0 : i32
    return %c0_i32, %c0_i32_0 : i32, i32
  }
  func.func @transform_4(%arg0: i32) -> (i32, i32) {
    %c0_i32 = arith.constant 0 : i32
    %c0_i32_0 = arith.constant 0 : i32
    %c0_i32_1 = arith.constant 0 : i32
    return %c0_i32, %c0_i32_0 : i32, i32
  }
  func.func @transform_5(%arg0: i32) -> (i32, i32) {
    %c0_i32 = arith.constant 0 : i32
    %c0_i32_0 = arith.constant 0 : i32
    %c0_i32_1 = arith.constant 0 : i32
    return %c0_i32, %c0_i32_0 : i32, i32
  }
  func.func @transform_6(%arg0: i32) -> (i32, i32, i32) {
    %c0_i32 = arith.constant 0 : i32
    %c0_i32_0 = arith.constant 0 : i32
    %c0_i32_1 = arith.constant 0 : i32
    return %arg0, %c0_i32, %c0_i32_0 : i32, i32, i32
  }
}

</mosaic_0001>

<llo_original>
// kernel: tpu_custom_call.1
$region0: #{tpu_custom_call.1}
  #allocation0 [shape = 'u32[]', space=smem, size = 0x4, offset = 0x4, fixed_abs, tag = 'smem constant byte address 0x4 - core index']
  #allocation1 [shape = 'u32[144,128]{1,0:T(1,128)}', space=vmem, size = 0x12000, scoped, tag = 'internal scratch']
  %s0 = inlined_call_operand.vmem [shape: bf16[1,4,512], index: 0, kind: input, shape index: {}]
  %s1 = inlined_call_operand.hbm [shape: f32[9,512], index: 1, kind: input, shape index: {}]
  %s2 = inlined_call_operand.vmem [shape: bf16[4,36], index: 2, kind: input, shape index: {}]
  %s3 = inlined_call_operand.vmem [shape: f32[4,1], index: 3, kind: input, shape index: {}]
  %s4 = inlined_call_operand.vmem [shape: bf16[4,36], index: 4, kind: input, shape index: {}]
  %s5 = inlined_call_operand.vmem [shape: f32[4,1], index: 5, kind: input, shape index: {}]
  %s6 = inlined_call_operand.hbm [shape: f32[1,4,512], index: 6, kind: output, shape index: {}]
  %s7 = sld [smem:[#allocation0]]
  $region38: #{tpu_custom_call.1} parent=0
    _
  %s9 = ssub.s32 1, %s7
  %s10 = scalar_select 0, %s9, %s7
  $region1: #{tpu_custom_call.1} parent=0
    #allocation2 [shape = 'u8[32768]{0}', space=vmem, size = 0x8000, scoped, tag = 'input window, operand 1, single buffered']
    #allocation3 [shape = 's32[1]{0}', space=sflag, size = 0x4, scoped, tag = 'scoped memory for tpu_custom_call.1']
    #allocation4 [shape = 's32[1]{0}', space=sflag, size = 0x4, scoped, tag = 'scoped memory for tpu_custom_call.1']
    #allocation5 [shape = 'u8[8192]{0}', space=vmem, size = 0x2000, scoped, tag = 'output window, operand 0, single buffered']
    %11 = vsyncpa [#allocation3], 0
    %12 = vsyncpa [#allocation4], 0
    // Predicated region
    $region2: #{tpu_custom_call.1} parent=1 // pred_check
      _
    $region3: #{tpu_custom_call.1} parent=1 // pred_check_branch
      %14 = sbr.rel (0) target = $region5
    $region4: #{tpu_custom_call.1} parent=1 // pred_region
      _
    $region5: #{tpu_custom_call.1} parent=1 // pred_fallthru
      _
    // Predicated region
    $region6: #{tpu_custom_call.1} parent=1 // pred_check
      _
    $region7: #{tpu_custom_call.1} parent=1 // pred_check_branch
      %16 = sbr.rel (0) target = $region9
    $region8: #{tpu_custom_call.1} parent=1 // pred_region
      %s18 = ssub.s32 1024, 1024
      %19 = vsyncadd [#allocation3], %s18
      %s20 = sshll.u32 [#allocation2], 4
      %s21 = int_to_ptr.vmem [resolvable:$true] %s20
      %26 = dma.hbm_to_vmem [thread:$0]  %s1, 1024, %s21, [#allocation3], 512, 512, 32
    $region9: #{tpu_custom_call.1} parent=1 // pred_fallthru
      _
    // Predicated region
    $region10: #{tpu_custom_call.1} parent=1 // pred_check
      _
    $region11: #{tpu_custom_call.1} parent=1 // pred_check_branch
      %28 = sbr.rel (0) target = $region13
    $region12: #{tpu_custom_call.1} parent=1 // pred_region
      _
    $region13: #{tpu_custom_call.1} parent=1 // pred_fallthru
      _
    // Predicated region
    $region14: #{tpu_custom_call.1} parent=1 // pred_check
      _
    $region15: #{tpu_custom_call.1} parent=1 // pred_check_branch
      %30 = sbr.rel (0) target = $region17
    $region16: #{tpu_custom_call.1} parent=1 // pred_region
      _
    $region17: #{tpu_custom_call.1} parent=1 // pred_fallthru
      _
    // Predicated region
    $region18: #{tpu_custom_call.1} parent=1 // pred_check
      _
    $region19: #{tpu_custom_call.1} parent=1 // pred_check_branch
      %32 = sbr.rel (0) target = $region21
    $region20: #{tpu_custom_call.1} parent=1 // pred_region
      _
    $region21: #{tpu_custom_call.1} parent=1 // pred_fallthru
      _
    // Predicated region
    $region22: #{tpu_custom_call.1} parent=1 // pred_check
      _
    $region23: #{tpu_custom_call.1} parent=1 // pred_check_branch
      %34 = sbr.rel (0) target = $region25
    $region24: #{tpu_custom_call.1} parent=1 // pred_region
      _
    $region25: #{tpu_custom_call.1} parent=1 // pred_fallthru
      _
    // Predicated region
    $region26: #{tpu_custom_call.1} parent=1 // pred_check
      _
    $region27: #{tpu_custom_call.1} parent=1 // pred_check_branch
      %36 = sbr.rel (0) target = $region29
    $region28: #{tpu_custom_call.1} parent=1 // pred_region
      %37 = dma.done [#allocation3], 1024
    $region29: #{tpu_custom_call.1} parent=1 // pred_fallthru
      _
    %v39 = vld [vmem:[%s0] sm:$0xff]
    %v40 = vunpack.c.l.bf16 %v39
    %v41 = vunpack.c.h.bf16 %v39
    %v42 = vld [vmem:[#allocation2] sm:$0xff]
    %v43 = vld [vmem:[#allocation2 + $0x8] sm:$0xff]
    %v44 = vld [vmem:[#allocation2 + $0x10] sm:$0xff]
    %v45 = vld [vmem:[#allocation2 + $0x18] sm:$0xff]
    %v46 = vld [vmem:[#allocation2 + $0x20] sm:$0x1]
    %v47 = vld [vmem:[#allocation2 + $0x28] sm:$0x1]
    %v48 = vld [vmem:[#allocation2 + $0x30] sm:$0x1]
    %v49 = vld [vmem:[#allocation2 + $0x38] sm:$0x1]
    %v50 = vld [vmem:[%s2] sm:$0x3]
    %v53 = vcombine.high %v40, %v40
    %v54 = vcombine.high %v41, %v41
    %55 = vrot.lane.b32.xlu0 %v40, 17
    %v56 = vpop.permute.xlu0 %55
    %57 = vrot.lane.b32.xlu0 %v53, 17
    %v58 = vpop.permute.xlu0 %57
    %59 = vrot.lane.b32.xlu0 %v41, 17
    %v60 = vpop.permute.xlu0 %59
    %61 = vrot.lane.b32.xlu0 %v54, 17
    %v62 = vpop.permute.xlu0 %61
    %vm63 = vcmask 138240
    %v64 = vsel %vm63, %v56, %v58
    %v65 = vsel %vm63, %v58, %v60
    %v66 = vsel %vm63, %v60, %v62
    %v71 = vsel %vm63, 0.0, %v56
    %v72 = vlaneseq
    %v73 = vshrl.u32 %v72, 7
    %v74 = vsub.s32 0, %v73
    %v75 = vrot.slane %v42, %v74
    %v76 = vlaneseq
    %v77 = vshrl.u32 %v76, 7
    %v78 = vsub.s32 0, %v77
    %v79 = vrot.slane %v43, %v78
    %v80 = vlaneseq
    %v81 = vshrl.u32 %v80, 7
    %v82 = vsub.s32 0, %v81
    %v83 = vrot.slane %v44, %v82
    %v84 = vlaneseq
    %v85 = vshrl.u32 %v84, 7
    %v86 = vsub.s32 0, %v85
    %v87 = vrot.slane %v45, %v86
    %v88 = vmul.f32 %v71, %v75
    %v89 = vmul.f32 %v64, %v79
    %v90 = vmul.f32 %v65, %v83
    %v91 = vmul.f32 %v66, %v87
    %92 = vrot.lane.b32.xlu0 %v40, 16
    %v93 = vpop.permute.xlu0 %92
    %94 = vrot.lane.b32.xlu0 %v53, 16
    %v95 = vpop.permute.xlu0 %94
    %96 = vrot.lane.b32.xlu0 %v41, 16
    %v97 = vpop.permute.xlu0 %96
    %98 = vrot.lane.b32.xlu0 %v54, 16
    %v99 = vpop.permute.xlu0 %98
    %vm100 = vcmask 130048
    %v101 = vsel %vm100, %v93, %v95
    %v102 = vsel %vm100, %v95, %v97
    %v103 = vsel %vm100, %v97, %v99
    %v108 = vsel %vm100, 0.0, %v93
    %v109 = vlaneseq
    %v110 = vshrl.u32 %v109, 7
    %v111 = vsub.s32 1, %v110
    %v112 = vrot.slane %v42, %v111
    %v113 = vlaneseq
    %v114 = vshrl.u32 %v113, 7
    %v115 = vsub.s32 1, %v114
    %v116 = vrot.slane %v43, %v115
    %v117 = vlaneseq
    %v118 = vshrl.u32 %v117, 7
    %v119 = vsub.s32 1, %v118
    %v120 = vrot.slane %v44, %v119
    %v121 = vlaneseq
    %v122 = vshrl.u32 %v121, 7
    %v123 = vsub.s32 1, %v122
    %v124 = vrot.slane %v45, %v123
    %v125 = vmul.f32 %v108, %v112
    %v126 = vmul.f32 %v101, %v116
    %v127 = vmul.f32 %v102, %v120
    %v128 = vmul.f32 %v103, %v124
    %129 = vrot.lane.b32.xlu0 %v40, 15
    %v130 = vpop.permute.xlu0 %129
    %131 = vrot.lane.b32.xlu0 %v53, 15
    %v132 = vpop.permute.xlu0 %131
    %133 = vrot.lane.b32.xlu0 %v41, 15
    %v134 = vpop.permute.xlu0 %133
    %135 = vrot.lane.b32.xlu0 %v54, 15
    %v136 = vpop.permute.xlu0 %135
    %vm137 = vcmask 121856
    %v138 = vsel %vm137, %v130, %v132
    %v139 = vsel %vm137, %v132, %v134
    %v140 = vsel %vm137, %v134, %v136
    %v145 = vsel %vm137, 0.0, %v130
    %v146 = vlaneseq
    %v147 = vshrl.u32 %v146, 7
    %v148 = vsub.s32 2, %v147
    %v149 = vrot.slane %v42, %v148
    %v150 = vlaneseq
    %v151 = vshrl.u32 %v150, 7
    %v152 = vsub.s32 2, %v151
    %v153 = vrot.slane %v43, %v152
    %v154 = vlaneseq
    %v155 = vshrl.u32 %v154, 7
    %v156 = vsub.s32 2, %v155
    %v157 = vrot.slane %v44, %v156
    %v158 = vlaneseq
    %v159 = vshrl.u32 %v158, 7
    %v160 = vsub.s32 2, %v159
    %v161 = vrot.slane %v45, %v160
    %v162 = vmul.f32 %v145, %v149
    %v163 = vmul.f32 %v138, %v153
    %v164 = vmul.f32 %v139, %v157
    %v165 = vmul.f32 %v140, %v161
    %166 = vrot.lane.b32.xlu0 %v40, 1
    %v167 = vpop.permute.xlu0 %166
    %168 = vrot.lane.b32.xlu0 %v53, 1
    %v169 = vpop.permute.xlu0 %168
    %170 = vrot.lane.b32.xlu0 %v41, 1
    %v171 = vpop.permute.xlu0 %170
    %172 = vrot.lane.b32.xlu0 %v54, 1
    %v173 = vpop.permute.xlu0 %172
    %vm174 = vcmask 7168
    %v175 = vsel %vm174, %v167, %v169
    %v176 = vsel %vm174, %v169, %v171
    %v177 = vsel %vm174, %v171, %v173
    %v182 = vsel %vm174, 0.0, %v167
    %v183 = vlaneseq
    %v184 = vshrl.u32 %v183, 7
    %v185 = vsub.s32 3, %v184
    %v186 = vrot.slane %v42, %v185
    %v187 = vlaneseq
    %v188 = vshrl.u32 %v187, 7
    %v189 = vsub.s32 3, %v188
    %v190 = vrot.slane %v43, %v189
    %v191 = vlaneseq
    %v192 = vshrl.u32 %v191, 7
    %v193 = vsub.s32 3, %v192
    %v194 = vrot.slane %v44, %v193
    %v195 = vlaneseq
    %v196 = vshrl.u32 %v195, 7
    %v197 = vsub.s32 3, %v196
    %v198 = vrot.slane %v45, %v197
    %v199 = vmul.f32 %v182, %v186
    %v200 = vmul.f32 %v175, %v190
    %v201 = vmul.f32 %v176, %v194
    %v202 = vmul.f32 %v177, %v198
    %v203 = vlaneseq
    %v204 = vshrl.u32 %v203, 7
    %v205 = vsub.s32 4, %v204
    %v206 = vrot.slane %v42, %v205
    %v207 = vlaneseq
    %v208 = vshrl.u32 %v207, 7
    %v209 = vsub.s32 4, %v208
    %v210 = vrot.slane %v43, %v209
    %v211 = vlaneseq
    %v212 = vshrl.u32 %v211, 7
    %v213 = vsub.s32 4, %v212
    %v214 = vrot.slane %v44, %v213
    %v215 = vlaneseq
    %v216 = vshrl.u32 %v215, 7
    %v217 = vsub.s32 4, %v216
    %v218 = vrot.slane %v45, %v217
    %v223 = vcombine.low %v206, %v210
    %v224 = vcombine.low %v214, %v218
    %v227 = vmul.f32 %v40, %v223
    %v228 = vmul.f32 %v41, %v224
    %229 = vrot.lane.b32.xlu0 %v40, 127
    %v230 = vpop.permute.xlu0 %229
    %231 = vrot.lane.b32.xlu0 %v53, 127
    %v232 = vpop.permute.xlu0 %231
    %233 = vrot.lane.b32.xlu0 %v41, 127
    %v234 = vpop.permute.xlu0 %233
    %235 = vrot.lane.b32.xlu0 %v54, 127
    %v236 = vpop.permute.xlu0 %235
    %vm237 = vcmask 1039360
    %v238 = vsel %vm237, %v230, %v232
    %v239 = vsel %vm237, %v232, %v234
    %v240 = vsel %vm237, %v234, %v236
    %v245 = vsel %vm237, %v236, 0.0
    %v246 = vlaneseq
    %v247 = vshrl.u32 %v246, 7
    %v248 = vsub.s32 5, %v247
    %v249 = vrot.slane %v42, %v248
    %v250 = vlaneseq
    %v251 = vshrl.u32 %v250, 7
    %v252 = vsub.s32 5, %v251
    %v253 = vrot.slane %v43, %v252
    %v254 = vlaneseq
    %v255 = vshrl.u32 %v254, 7
    %v256 = vsub.s32 5, %v255
    %v257 = vrot.slane %v44, %v256
    %v258 = vlaneseq
    %v259 = vshrl.u32 %v258, 7
    %v260 = vsub.s32 5, %v259
    %v261 = vrot.slane %v45, %v260
    %v262 = vmul.f32 %v238, %v249
    %v263 = vmul.f32 %v239, %v253
    %v264 = vmul.f32 %v240, %v257
    %v265 = vmul.f32 %v245, %v261
    %266 = vrot.lane.b32.xlu0 %v40, 113
    %v267 = vpop.permute.xlu0 %266
    %268 = vrot.lane.b32.xlu0 %v53, 113
    %v269 = vpop.permute.xlu0 %268
    %270 = vrot.lane.b32.xlu0 %v41, 113
    %v271 = vpop.permute.xlu0 %270
    %272 = vrot.lane.b32.xlu0 %v54, 113
    %v273 = vpop.permute.xlu0 %272
    %vm274 = vcmask 924672
    %v275 = vsel %vm274, %v267, %v269
    %v276 = vsel %vm274, %v269, %v271
    %v277 = vsel %vm274, %v271, %v273
    %v282 = vsel %vm274, %v273, 0.0
    %v283 = vlaneseq
    %v284 = vshrl.u32 %v283, 7
    %v285 = vsub.s32 6, %v284
    %v286 = vrot.slane %v42, %v285
    %v287 = vlaneseq
    %v288 = vshrl.u32 %v287, 7
    %v289 = vsub.s32 6, %v288
    %v290 = vrot.slane %v43, %v289
    %v291 = vlaneseq
    %v292 = vshrl.u32 %v291, 7
    %v293 = vsub.s32 6, %v292
    %v294 = vrot.slane %v44, %v293
    %v295 = vlaneseq
    %v296 = vshrl.u32 %v295, 7
    %v297 = vsub.s32 6, %v296
    %v298 = vrot.slane %v45, %v297
    %v299 = vmul.f32 %v275, %v286
    %v300 = vmul.f32 %v276, %v290
    %v301 = vmul.f32 %v277, %v294
    %v302 = vmul.f32 %v282, %v298
    %303 = vrot.lane.b32.xlu0 %v40, 112
    %v304 = vpop.permute.xlu0 %303
    %305 = vrot.lane.b32.xlu0 %v53, 112
    %v306 = vpop.permute.xlu0 %305
    %307 = vrot.lane.b32.xlu0 %v41, 112
    %v308 = vpop.permute.xlu0 %307
    %309 = vrot.lane.b32.xlu0 %v54, 112
    %v310 = vpop.permute.xlu0 %309
    %vm311 = vcmask 916480
    %v312 = vsel %vm311, %v304, %v306
    %v313 = vsel %vm311, %v306, %v308
    %v314 = vsel %vm311, %v308, %v310
    %v319 = vsel %vm311, %v310, 0.0
    %v320 = vlaneseq
    %v321 = vshrl.u32 %v320, 7
    %v322 = vsub.s32 7, %v321
    %v323 = vrot.slane %v42, %v322
    %v324 = vlaneseq
    %v325 = vshrl.u32 %v324, 7
    %v326 = vsub.s32 7, %v325
    %v327 = vrot.slane %v43, %v326
    %v328 = vlaneseq
    %v329 = vshrl.u32 %v328, 7
    %v330 = vsub.s32 7, %v329
    %v331 = vrot.slane %v44, %v330
    %v332 = vlaneseq
    %v333 = vshrl.u32 %v332, 7
    %v334 = vsub.s32 7, %v333
    %v335 = vrot.slane %v45, %v334
    %v336 = vmul.f32 %v312, %v323
    %v337 = vmul.f32 %v313, %v327
    %v338 = vmul.f32 %v314, %v331
    %v339 = vmul.f32 %v319, %v335
    %340 = vrot.lane.b32.xlu0 %v40, 111
    %v341 = vpop.permute.xlu0 %340
    %342 = vrot.lane.b32.xlu0 %v53, 111
    %v343 = vpop.permute.xlu0 %342
    %344 = vrot.lane.b32.xlu0 %v41, 111
    %v345 = vpop.permute.xlu0 %344
    %346 = vrot.lane.b32.xlu0 %v54, 111
    %v347 = vpop.permute.xlu0 %346
    %vm348 = vcmask 908288
    %v349 = vsel %vm348, %v341, %v343
    %v350 = vsel %vm348, %v343, %v345
    %v351 = vsel %vm348, %v345, %v347
    %v356 = vsel %vm348, %v347, 0.0
    %v357 = vlaneseq
    %v358 = vshrl.u32 %v357, 7
    %v359 = vsub.s32 0, %v358
    %v360 = vrot.slane %v46, %v359
    %v361 = vlaneseq
    %v362 = vshrl.u32 %v361, 7
    %v363 = vsub.s32 0, %v362
    %v364 = vrot.slane %v47, %v363
    %v365 = vlaneseq
    %v366 = vshrl.u32 %v365, 7
    %v367 = vsub.s32 0, %v366
    %v368 = vrot.slane %v48, %v367
    %v369 = vlaneseq
    %v370 = vshrl.u32 %v369, 7
    %v371 = vsub.s32 0, %v370
    %v372 = vrot.slane %v49, %v371
    %v373 = vmul.f32 %v349, %v360
    %v374 = vmul.f32 %v350, %v364
    %v375 = vmul.f32 %v351, %v368
    %v376 = vmul.f32 %v356, %v372
    %v381 = vrot.slane %v125, 4
    %v382 = vrot.slane %v126, 4
    %v383 = vrot.slane %v127, 4
    %v384 = vrot.slane %v128, 4
    %v393 = vrot.slane %v199, 4
    %v394 = vrot.slane %v200, 4
    %v395 = vrot.slane %v201, 4
    %v396 = vrot.slane %v202, 4
    %v403 = vcombine.high %v227, %v227
    %v404 = vcombine.high %v228, %v228
    %v411 = vrot.slane %v262, 4
    %v412 = vrot.slane %v263, 4
    %v413 = vrot.slane %v264, 4
    %v414 = vrot.slane %v265, 4
    %v423 = vrot.slane %v336, 4
    %v424 = vrot.slane %v337, 4
    %v425 = vrot.slane %v338, 4
    %v426 = vrot.slane %v339, 4
    %vm431 = vcmask 1043456
    %v432 = vsel %vm431, %v88, %v381
    %v433 = vsel %vm431, %v89, %v382
    %v434 = vsel %vm431, %v90, %v383
    %v435 = vsel %vm431, %v91, %v384
    %v436 = vsel %vm431, %v162, %v393
    %v437 = vsel %vm431, %v163, %v394
    %v438 = vsel %vm431, %v164, %v395
    %v439 = vsel %vm431, %v165, %v396
    %v440 = vsel %vm431, %v227, %v411
    %v441 = vsel %vm431, %v403, %v412
    %v442 = vsel %vm431, %v228, %v413
    %v443 = vsel %vm431, %v404, %v414
    %v444 = vsel %vm431, %v299, %v423
    %v445 = vsel %vm431, %v300, %v424
    %v446 = vsel %vm431, %v301, %v425
    %v447 = vsel %vm431, %v302, %v426
    %v448 = vpack.c.bf16 %v436, %v432
    %v449 = vpack.c.bf16 %v437, %v433
    %v450 = vpack.c.bf16 %v438, %v434
    %v451 = vpack.c.bf16 %v439, %v435
    %v452 = vpack.c.bf16 %v444, %v440
    %v453 = vpack.c.bf16 %v445, %v441
    %v454 = vpack.c.bf16 %v446, %v442
    %v455 = vpack.c.bf16 %v447, %v443
    %v456 = vpack.c.bf16 %v373, %v373
    %v457 = vpack.c.bf16 %v374, %v374
    %v458 = vpack.c.bf16 %v375, %v375
    %v459 = vpack.c.bf16 %v376, %v376
    %v460 = vld [vmem:[%s3] sm:$0xf]
    %462 = vset.pattern.permute.xlu0 0
    %463 = vperm.xlu0 %462, %v460
    %v464 = vpop.permute.xlu0 %463
    %vm466 = vcmask 293888
    %v468 = vsel %vm466, %v50, 0
    %vm470 = vcmask 1041408
    %v472 = vsel %vm470, %v456, 0
    %v475 = vsel %vm470, %v457, 0
    %v478 = vsel %vm470, %v458, 0
    %v481 = vsel %vm470, %v459, 0
    %483 = vmatprep.subr.bf16.mxu0 %v449
    %484 = vmatpush1.bf16.msra.mxu0 %v448
    %485 = vmatprep.subr.bf16.mxu0 %v453
    %486 = vmatpush1.bf16.msra.mxu0 %v452
    %487 = vmatprep.subr.bf16.mxu0 %v475
    %488 = vmatpush1.bf16.msra.mxu0 %v472
    %489 = vmatprep.subr.bf16.mxu0 0
    %490 = vmatpush1.bf16.msra.mxu0 0
    %491 = vmatprep.subr.bf16.mxu0 0
    %492 = vmatpush1.bf16.msra.mxu0 0
    %493 = vmatprep.subr.bf16.mxu0 0
    %494 = vmatpush1.bf16.msra.mxu0 0
    %495 = vmatprep.subr.bf16.mxu0 0
    %496 = vmatpush1.bf16.msra.mxu0 0
    %497 = vmatprep.subr.bf16.mxu0 0
    %498 = vmatpush1.bf16.msra.mxu0 0
    %499 = vmatprep.subr.bf16.mxu0 0
    %500 = vmatpush1.bf16.msra.mxu0 0
    %501 = vmatprep.subr.bf16.mxu0 0
    %502 = vmatpush1.bf16.msra.mxu0 0
    %503 = vmatprep.subr.bf16.mxu0 0
    %504 = vmatpush1.bf16.msra.mxu0 0
    %505 = vmatprep.subr.bf16.mxu0 0
    %506 = vmatpush1.bf16.msra.mxu0 0
    %507 = vmatprep.subr.bf16.mxu0 0
    %508 = vmatpush1.bf16.msra.mxu0 0
    %509 = vmatprep.subr.bf16.mxu0 0
    %510 = vmatpush1.bf16.msra.mxu0 0
    %511 = vmatprep.subr.bf16.mxu0 0
    %512 = vmatpush1.bf16.msra.mxu0 0
    %513 = vmatprep.subr.bf16.mxu0 0
    %514 = vmatpush1.bf16.msra.mxu0 0
    %515 = vmatprep.mubr.bf16.mxu0 0
    %516 = vmatmul.mubr.bf16.gmra.mrb[0].mxu0 %v468
    %v517 = vpop.f32.mrb[0].mxu0
    %v518 = vadd.f32 %v464, %v517
    %v519 = vpop.f32.mrb[0].mxu0
    %v520 = vadd.f32 %v464, %v519
    %v521 = vpop.f32.mrb[0].mxu0
    %v522 = vpop.f32.mrb[0].mxu0
    %523 = vdwg.mxu0
    %524 = vmatprep.subr.bf16.mxu0 %v451
    %525 = vmatpush1.bf16.msra.mxu0 %v450
    %526 = vmatprep.subr.bf16.mxu0 %v455
    %527 = vmatpush1.bf16.msra.mxu0 %v454
    %528 = vmatprep.subr.bf16.mxu0 %v481
    %529 = vmatpush1.bf16.msra.mxu0 %v478
    %530 = vmatprep.subr.bf16.mxu0 0
    %531 = vmatpush1.bf16.msra.mxu0 0
    %532 = vmatprep.subr.bf16.mxu0 0
    %533 = vmatpush1.bf16.msra.mxu0 0
    %534 = vmatprep.subr.bf16.mxu0 0
    %535 = vmatpush1.bf16.msra.mxu0 0
    %536 = vmatprep.subr.bf16.mxu0 0
    %537 = vmatpush1.bf16.msra.mxu0 0
    %538 = vmatprep.subr.bf16.mxu0 0
    %539 = vmatpush1.bf16.msra.mxu0 0
    %540 = vmatprep.subr.bf16.mxu0 0
    %541 = vmatpush1.bf16.msra.mxu0 0
    %542 = vmatprep.subr.bf16.mxu0 0
    %543 = vmatpush1.bf16.msra.mxu0 0
    %544 = vmatprep.subr.bf16.mxu0 0
    %545 = vmatpush1.bf16.msra.mxu0 0
    %546 = vmatprep.subr.bf16.mxu0 0
    %547 = vmatpush1.bf16.msra.mxu0 0
    %548 = vmatprep.subr.bf16.mxu0 0
    %549 = vmatpush1.bf16.msra.mxu0 0
    %550 = vmatprep.subr.bf16.mxu0 0
    %551 = vmatpush1.bf16.msra.mxu0 0
    %552 = vmatprep.subr.bf16.mxu0 0
    %553 = vmatpush1.bf16.msra.mxu0 0
    %554 = vmatprep.subr.bf16.mxu0 0
    %555 = vmatpush1.bf16.msra.mxu0 0
    %556 = vmatprep.mubr.bf16.mxu0 0
    %557 = vmatmul.mubr.bf16.gmra.mrb[0].mxu0 %v468
    %v558 = vpop.f32.mrb[0].mxu0
    %v559 = vadd.f32 %v464, %v558
    %v560 = vpop.f32.mrb[0].mxu0
    %v561 = vadd.f32 %v464, %v560
    %v562 = vpop.f32.mrb[0].mxu0
    %v563 = vpop.f32.mrb[0].mxu0
    %564 = vdwg.mxu0
    %v565 = vmul.f32 %v518, 0.5
    %v566 = vmul.f32 %v520, 0.5
    %v567 = vmul.f32 %v559, 0.5
    %v568 = vmul.f32 %v561, 0.5
    %v569 = vmul.f32 %v518, 0.70710677
    %v570 = vmul.f32 %v520, 0.70710677
    %v571 = vmul.f32 %v559, 0.70710677
    %v572 = vmul.f32 %v561, 0.70710677
    %v573 = vand.u32 2147483647, %v569
    %v574 = vand.u32 2147483647, %v570
    %v575 = vand.u32 2147483647, %v571
    %v576 = vand.u32 2147483647, %v572
    %v577 = vmul.f32 %v573, 0.3275911
    %v578 = vmul.f32 %v574, 0.3275911
    %v579 = vmul.f32 %v575, 0.3275911
    %v580 = vmul.f32 %v576, 0.3275911
    %v581 = vadd.f32 %v577, 1.0
    %v582 = vadd.f32 %v578, 1.0
    %v583 = vadd.f32 %v579, 1.0
    %v584 = vadd.f32 %v580, 1.0
    %v585 = vrcp.pop %v581
    %v586 = vmul.f32 1.0, %v585
    %v587 = vrcp.pop %v582
    %v588 = vmul.f32 1.0, %v587
    %v589 = vrcp.pop %v583
    %v590 = vmul.f32 1.0, %v589
    %v591 = vrcp.pop %v584
    %v592 = vmul.f32 1.0, %v591
    %v593 = vmul.f32 %v586, 1.0614054
    %v594 = vmul.f32 %v588, 1.0614054
    %v595 = vmul.f32 %v590, 1.0614054
    %v596 = vmul.f32 %v592, 1.0614054
    %v597 = vadd.f32 %v593, -1.4531521
    %v598 = vadd.f32 %v594, -1.4531521
    %v599 = vadd.f32 %v595, -1.4531521
    %v600 = vadd.f32 %v596, -1.4531521
    %v601 = vmul.f32 %v597, %v586
    %v602 = vmul.f32 %v598, %v588
    %v603 = vmul.f32 %v599, %v590
    %v604 = vmul.f32 %v600, %v592
    %v605 = vadd.f32 %v601, 1.4214138
    %v606 = vadd.f32 %v602, 1.4214138
    %v607 = vadd.f32 %v603, 1.4214138
    %v608 = vadd.f32 %v604, 1.4214138
    %v609 = vmul.f32 %v605, %v586
    %v610 = vmul.f32 %v606, %v588
    %v611 = vmul.f32 %v607, %v590
    %v612 = vmul.f32 %v608, %v592
    %v613 = vadd.f32 %v609, -0.28449672
    %v614 = vadd.f32 %v610, -0.28449672
    %v615 = vadd.f32 %v611, -0.28449672
    %v616 = vadd.f32 %v612, -0.28449672
    %v617 = vmul.f32 %v613, %v586
    %v618 = vmul.f32 %v614, %v588
    %v619 = vmul.f32 %v615, %v590
    %v620 = vmul.f32 %v616, %v592
    %v621 = vadd.f32 %v617, 0.2548296
    %v622 = vadd.f32 %v618, 0.2548296
    %v623 = vadd.f32 %v619, 0.2548296
    %v624 = vadd.f32 %v620, 0.2548296
    %v625 = vmul.f32 %v621, %v586
    %v626 = vmul.f32 %v622, %v588
    %v627 = vmul.f32 %v623, %v590
    %v628 = vmul.f32 %v624, %v592
    %v629 = vsub.f32 0.0, %v573
    %v630 = vsub.f32 0.0, %v574
    %v631 = vsub.f32 0.0, %v575
    %v632 = vsub.f32 0.0, %v576
    %v633 = vmul.f32 %v629, %v573
    %v634 = vmul.f32 %v630, %v574
    %v635 = vmul.f32 %v631, %v575
    %v636 = vmul.f32 %v632, %v576
    %v637 = vmul.f32 %v633, 1.442695
    %v638 = vpow.pop %v637
    %v639 = vmul.f32 %v634, 1.442695
    %v640 = vpow.pop %v639
    %v641 = vmul.f32 %v635, 1.442695
    %v642 = vpow.pop %v641
    %v643 = vmul.f32 %v636, 1.442695
    %v644 = vpow.pop %v643
    %v645 = vmul.f32 %v625, %v638
    %v646 = vmul.f32 %v626, %v640
    %v647 = vmul.f32 %v627, %v642
    %v648 = vmul.f32 %v628, %v644
    %v649 = vsub.f32 1.0, %v645
    %v650 = vsub.f32 1.0, %v646
    %v651 = vsub.f32 1.0, %v647
    %v652 = vsub.f32 1.0, %v648
    %vm653 = vcmp.ge.f32.partialorder %v569, 0.0
    %vm654 = vcmp.ge.f32.partialorder %v570, 0.0
    %vm655 = vcmp.ge.f32.partialorder %v571, 0.0
    %vm656 = vcmp.ge.f32.partialorder %v572, 0.0
    %v657 = vsub.f32 0.0, %v649
    %v658 = vsub.f32 0.0, %v650
    %v659 = vsub.f32 0.0, %v651
    %v660 = vsub.f32 0.0, %v652
    %v661 = vsel %vm653, %v649, %v657
    %v662 = vsel %vm654, %v650, %v658
    %v663 = vsel %vm655, %v651, %v659
    %v664 = vsel %vm656, %v652, %v660
    %v665 = vadd.f32 %v661, 1.0
    %v666 = vadd.f32 %v662, 1.0
    %v667 = vadd.f32 %v663, 1.0
    %v668 = vadd.f32 %v664, 1.0
    %v669 = vmul.f32 %v565, %v665
    %v670 = vmul.f32 %v566, %v666
    %v671 = vmul.f32 %v567, %v667
    %v672 = vmul.f32 %v568, %v668
    %v673 = vld [vmem:[%s4] sm:$0x3]
    %678 = vrot.lane.b32.xlu0 %v669, 17
    %v679 = vpop.permute.xlu0 %678
    %680 = vrot.lane.b32.xlu0 %v670, 17
    %v681 = vpop.permute.xlu0 %680
    %682 = vrot.lane.b32.xlu0 %v671, 17
    %v683 = vpop.permute.xlu0 %682
    %684 = vrot.lane.b32.xlu0 %v672, 17
    %v685 = vpop.permute.xlu0 %684
    %v686 = vsel %vm63, %v679, %v681
    %v687 = vsel %vm63, %v681, %v683
    %v688 = vsel %vm63, %v683, %v685
    %v693 = vsel %vm63, 0.0, %v679
    %v694 = vmul.f32 %v693, %v75
    %v695 = vmul.f32 %v686, %v79
    %v696 = vmul.f32 %v687, %v83
    %v697 = vmul.f32 %v688, %v87
    %698 = vrot.lane.b32.xlu0 %v669, 16
    %v699 = vpop.permute.xlu0 %698
    %700 = vrot.lane.b32.xlu0 %v670, 16
    %v701 = vpop.permute.xlu0 %700
    %702 = vrot.lane.b32.xlu0 %v671, 16
    %v703 = vpop.permute.xlu0 %702
    %704 = vrot.lane.b32.xlu0 %v672, 16
    %v705 = vpop.permute.xlu0 %704
    %v706 = vsel %vm100, %v699, %v701
    %v707 = vsel %vm100, %v701, %v703
    %v708 = vsel %vm100, %v703, %v705
    %v713 = vsel %vm100, 0.0, %v699
    %v714 = vmul.f32 %v713, %v112
    %v715 = vmul.f32 %v706, %v116
    %v716 = vmul.f32 %v707, %v120
    %v717 = vmul.f32 %v708, %v124
    %718 = vrot.lane.b32.xlu0 %v669, 15
    %v719 = vpop.permute.xlu0 %718
    %720 = vrot.lane.b32.xlu0 %v670, 15
    %v721 = vpop.permute.xlu0 %720
    %722 = vrot.lane.b32.xlu0 %v671, 15
    %v723 = vpop.permute.xlu0 %722
    %724 = vrot.lane.b32.xlu0 %v672, 15
    %v725 = vpop.permute.xlu0 %724
    %v726 = vsel %vm137, %v719, %v721
    %v727 = vsel %vm137, %v721, %v723
    %v728 = vsel %vm137, %v723, %v725
    %v733 = vsel %vm137, 0.0, %v719
    %v734 = vmul.f32 %v733, %v149
    %v735 = vmul.f32 %v726, %v153
    %v736 = vmul.f32 %v727, %v157
    %v737 = vmul.f32 %v728, %v161
    %738 = vrot.lane.b32.xlu0 %v669, 1
    %v739 = vpop.permute.xlu0 %738
    %740 = vrot.lane.b32.xlu0 %v670, 1
    %v741 = vpop.permute.xlu0 %740
    %742 = vrot.lane.b32.xlu0 %v671, 1
    %v743 = vpop.permute.xlu0 %742
    %744 = vrot.lane.b32.xlu0 %v672, 1
    %v745 = vpop.permute.xlu0 %744
    %v746 = vsel %vm174, %v739, %v741
    %v747 = vsel %vm174, %v741, %v743
    %v748 = vsel %vm174, %v743, %v745
    %v753 = vsel %vm174, 0.0, %v739
    %v754 = vmul.f32 %v753, %v186
    %v755 = vmul.f32 %v746, %v190
    %v756 = vmul.f32 %v747, %v194
    %v757 = vmul.f32 %v748, %v198
    %v758 = vmul.f32 %v669, %v206
    %v759 = vmul.f32 %v670, %v210
    %v760 = vmul.f32 %v671, %v214
    %v761 = vmul.f32 %v672, %v218
    %762 = vrot.lane.b32.xlu0 %v669, 127
    %v763 = vpop.permute.xlu0 %762
    %764 = vrot.lane.b32.xlu0 %v670, 127
    %v765 = vpop.permute.xlu0 %764
    %766 = vrot.lane.b32.xlu0 %v671, 127
    %v767 = vpop.permute.xlu0 %766
    %768 = vrot.lane.b32.xlu0 %v672, 127
    %v769 = vpop.permute.xlu0 %768
    %v770 = vsel %vm237, %v763, %v765
    %v771 = vsel %vm237, %v765, %v767
    %v772 = vsel %vm237, %v767, %v769
    %v777 = vsel %vm237, %v769, 0.0
    %v778 = vmul.f32 %v770, %v249
    %v779 = vmul.f32 %v771, %v253
    %v780 = vmul.f32 %v772, %v257
    %v781 = vmul.f32 %v777, %v261
    %782 = vrot.lane.b32.xlu0 %v669, 113
    %v783 = vpop.permute.xlu0 %782
    %784 = vrot.lane.b32.xlu0 %v670, 113
    %v785 = vpop.permute.xlu0 %784
    %786 = vrot.lane.b32.xlu0 %v671, 113
    %v787 = vpop.permute.xlu0 %786
    %788 = vrot.lane.b32.xlu0 %v672, 113
    %v789 = vpop.permute.xlu0 %788
    %v790 = vsel %vm274, %v783, %v785
    %v791 = vsel %vm274, %v785, %v787
    %v792 = vsel %vm274, %v787, %v789
    %v797 = vsel %vm274, %v789, 0.0
    %v798 = vmul.f32 %v790, %v286
    %v799 = vmul.f32 %v791, %v290
    %v800 = vmul.f32 %v792, %v294
    %v801 = vmul.f32 %v797, %v298
    %802 = vrot.lane.b32.xlu0 %v669, 112
    %v803 = vpop.permute.xlu0 %802
    %804 = vrot.lane.b32.xlu0 %v670, 112
    %v805 = vpop.permute.xlu0 %804
    %806 = vrot.lane.b32.xlu0 %v671, 112
    %v807 = vpop.permute.xlu0 %806
    %808 = vrot.lane.b32.xlu0 %v672, 112
    %v809 = vpop.permute.xlu0 %808
    %v810 = vsel %vm311, %v803, %v805
    %v811 = vsel %vm311, %v805, %v807
    %v812 = vsel %vm311, %v807, %v809
    %v817 = vsel %vm311, %v809, 0.0
    %v818 = vmul.f32 %v810, %v323
    %v819 = vmul.f32 %v811, %v327
    %v820 = vmul.f32 %v812, %v331
    %v821 = vmul.f32 %v817, %v335
    %822 = vrot.lane.b32.xlu0 %v669, 111
    %v823 = vpop.permute.xlu0 %822
    %824 = vrot.lane.b32.xlu0 %v670, 111
    %v825 = vpop.permute.xlu0 %824
    %826 = vrot.lane.b32.xlu0 %v671, 111
    %v827 = vpop.permute.xlu0 %826
    %828 = vrot.lane.b32.xlu0 %v672, 111
    %v829 = vpop.permute.xlu0 %828
    %v830 = vsel %vm348, %v823, %v825
    %v831 = vsel %vm348, %v825, %v827
    %v832 = vsel %vm348, %v827, %v829
    %v837 = vsel %vm348, %v829, 0.0
    %v838 = vmul.f32 %v830, %v360
    %v839 = vmul.f32 %v831, %v364
    %v840 = vmul.f32 %v832, %v368
    %v841 = vmul.f32 %v837, %v372
    %v846 = vrot.slane %v714, 4
    %v847 = vrot.slane %v715, 4
    %v848 = vrot.slane %v716, 4
    %v849 = vrot.slane %v717, 4
    %v858 = vrot.slane %v754, 4
    %v859 = vrot.slane %v755, 4
    %v860 = vrot.slane %v756, 4
    %v861 = vrot.slane %v757, 4
    %v870 = vrot.slane %v778, 4
    %v871 = vrot.slane %v779, 4
    %v872 = vrot.slane %v780, 4
    %v873 = vrot.slane %v781, 4
    %v882 = vrot.slane %v818, 4
    %v883 = vrot.slane %v819, 4
    %v884 = vrot.slane %v820, 4
    %v885 = vrot.slane %v821, 4
    %v890 = vsel %vm431, %v694, %v846
    %v891 = vsel %vm431, %v695, %v847
    %v892 = vsel %vm431, %v696, %v848
    %v893 = vsel %vm431, %v697, %v849
    %v894 = vsel %vm431, %v734, %v858
    %v895 = vsel %vm431, %v735, %v859
    %v896 = vsel %vm431, %v736, %v860
    %v897 = vsel %vm431, %v737, %v861
    %v898 = vsel %vm431, %v758, %v870
    %v899 = vsel %vm431, %v759, %v871
    %v900 = vsel %vm431, %v760, %v872
    %v901 = vsel %vm431, %v761, %v873
    %v902 = vsel %vm431, %v798, %v882
    %v903 = vsel %vm431, %v799, %v883
    %v904 = vsel %vm431, %v800, %v884
    %v905 = vsel %vm431, %v801, %v885
    %v906 = vpack.c.bf16 %v894, %v890
    %v907 = vpack.c.bf16 %v895, %v891
    %v908 = vpack.c.bf16 %v896, %v892
    %v909 = vpack.c.bf16 %v897, %v893
    %v910 = vpack.c.bf16 %v902, %v898
    %v911 = vpack.c.bf16 %v903, %v899
    %v912 = vpack.c.bf16 %v904, %v900
    %v913 = vpack.c.bf16 %v905, %v901
    %v914 = vpack.c.bf16 %v838, %v838
    %v915 = vpack.c.bf16 %v839, %v839
    %v916 = vpack.c.bf16 %v840, %v840
    %v917 = vpack.c.bf16 %v841, %v841
    %v918 = vld [vmem:[%s5] sm:$0xf]
    %920 = vset.pattern.permute.xlu0 0
    %921 = vperm.xlu0 %920, %v918
    %v922 = vpop.permute.xlu0 %921
    %v925 = vsel %vm466, %v673, 0
    %v928 = vsel %vm470, %v914, 0
    %v931 = vsel %vm470, %v915, 0
    %v934 = vsel %vm470, %v916, 0
    %v937 = vsel %vm470, %v917, 0
    %939 = vmatprep.subr.bf16.mxu0 %v907
    %940 = vmatpush1.bf16.msra.mxu0 %v906
    %941 = vmatprep.subr.bf16.mxu0 %v911
    %942 = vmatpush1.bf16.msra.mxu0 %v910
    %943 = vmatprep.subr.bf16.mxu0 %v931
    %944 = vmatpush1.bf16.msra.mxu0 %v928
    %945 = vmatprep.subr.bf16.mxu0 0
    %946 = vmatpush1.bf16.msra.mxu0 0
    %947 = vmatprep.subr.bf16.mxu0 0
    %948 = vmatpush1.bf16.msra.mxu0 0
    %949 = vmatprep.subr.bf16.mxu0 0
    %950 = vmatpush1.bf16.msra.mxu0 0
    %951 = vmatprep.subr.bf16.mxu0 0
    %952 = vmatpush1.bf16.msra.mxu0 0
    %953 = vmatprep.subr.bf16.mxu0 0
    %954 = vmatpush1.bf16.msra.mxu0 0
    %955 = vmatprep.subr.bf16.mxu0 0
    %956 = vmatpush1.bf16.msra.mxu0 0
    %957 = vmatprep.subr.bf16.mxu0 0
    %958 = vmatpush1.bf16.msra.mxu0 0
    %959 = vmatprep.subr.bf16.mxu0 0
    %960 = vmatpush1.bf16.msra.mxu0 0
    %961 = vmatprep.subr.bf16.mxu0 0
    %962 = vmatpush1.bf16.msra.mxu0 0
    %963 = vmatprep.subr.bf16.mxu0 0
    %964 = vmatpush1.bf16.msra.mxu0 0
    %965 = vmatprep.subr.bf16.mxu0 0
    %966 = vmatpush1.bf16.msra.mxu0 0
    %967 = vmatprep.subr.bf16.mxu0 0
    %968 = vmatpush1.bf16.msra.mxu0 0
    %969 = vmatprep.subr.bf16.mxu0 0
    %970 = vmatpush1.bf16.msra.mxu0 0
    %971 = vmatprep.mubr.bf16.mxu0 0
    %972 = vmatmul.mubr.bf16.gmra.mrb[0].mxu0 %v925
    %v973 = vpop.f32.mrb[0].mxu0
    %v974 = vadd.f32 %v922, %v973
    %v975 = vpop.f32.mrb[0].mxu0
    %v976 = vadd.f32 %v922, %v975
    %v977 = vpop.f32.mrb[0].mxu0
    %v978 = vpop.f32.mrb[0].mxu0
    %979 = vdwg.mxu0
    %980 = vmatprep.subr.bf16.mxu0 %v909
    %981 = vmatpush1.bf16.msra.mxu0 %v908
    %982 = vmatprep.subr.bf16.mxu0 %v913
    %983 = vmatpush1.bf16.msra.mxu0 %v912
    %984 = vmatprep.subr.bf16.mxu0 %v937
    %985 = vmatpush1.bf16.msra.mxu0 %v934
    %986 = vmatprep.subr.bf16.mxu0 0
    %987 = vmatpush1.bf16.msra.mxu0 0
    %988 = vmatprep.subr.bf16.mxu0 0
    %989 = vmatpush1.bf16.msra.mxu0 0
    %990 = vmatprep.subr.bf16.mxu0 0
    %991 = vmatpush1.bf16.msra.mxu0 0
    %992 = vmatprep.subr.bf16.mxu0 0
    %993 = vmatpush1.bf16.msra.mxu0 0
    %994 = vmatprep.subr.bf16.mxu0 0
    %995 = vmatpush1.bf16.msra.mxu0 0
    %996 = vmatprep.subr.bf16.mxu0 0
    %997 = vmatpush1.bf16.msra.mxu0 0
    %998 = vmatprep.subr.bf16.mxu0 0
    %999 = vmatpush1.bf16.msra.mxu0 0
    %1000 = vmatprep.subr.bf16.mxu0 0
    %1001 = vmatpush1.bf16.msra.mxu0 0
    %1002 = vmatprep.subr.bf16.mxu0 0
    %1003 = vmatpush1.bf16.msra.mxu0 0
    %1004 = vmatprep.subr.bf16.mxu0 0
    %1005 = vmatpush1.bf16.msra.mxu0 0
    %1006 = vmatprep.subr.bf16.mxu0 0
    %1007 = vmatpush1.bf16.msra.mxu0 0
    %1008 = vmatprep.subr.bf16.mxu0 0
    %1009 = vmatpush1.bf16.msra.mxu0 0
    %1010 = vmatprep.subr.bf16.mxu0 0
    %1011 = vmatpush1.bf16.msra.mxu0 0
    %1012 = vmatprep.mubr.bf16.mxu0 0
    %1013 = vmatmul.mubr.bf16.gmra.mrb[0].mxu0 %v925
    %v1014 = vpop.f32.mrb[0].mxu0
    %v1015 = vadd.f32 %v922, %v1014
    %v1016 = vpop.f32.mrb[0].mxu0
    %v1017 = vadd.f32 %v922, %v1016
    %v1018 = vpop.f32.mrb[0].mxu0
    %v1019 = vpop.f32.mrb[0].mxu0
    %1020 = vdwg.mxu0
    %v1021 = vmul.f32 %v974, 0.5
    %v1022 = vmul.f32 %v976, 0.5
    %v1023 = vmul.f32 %v1015, 0.5
    %v1024 = vmul.f32 %v1017, 0.5
    %v1025 = vmul.f32 %v974, 0.70710677
    %v1026 = vmul.f32 %v976, 0.70710677
    %v1027 = vmul.f32 %v1015, 0.70710677
    %v1028 = vmul.f32 %v1017, 0.70710677
    %v1029 = vand.u32 2147483647, %v1025
    %v1030 = vand.u32 2147483647, %v1026
    %v1031 = vand.u32 2147483647, %v1027
    %v1032 = vand.u32 2147483647, %v1028
    %v1033 = vmul.f32 %v1029, 0.3275911
    %v1034 = vmul.f32 %v1030, 0.3275911
    %v1035 = vmul.f32 %v1031, 0.3275911
    %v1036 = vmul.f32 %v1032, 0.3275911
    %v1037 = vadd.f32 %v1033, 1.0
    %v1038 = vadd.f32 %v1034, 1.0
    %v1039 = vadd.f32 %v1035, 1.0
    %v1040 = vadd.f32 %v1036, 1.0
    %v1041 = vrcp.pop %v1037
    %v1042 = vmul.f32 1.0, %v1041
    %v1043 = vrcp.pop %v1038
    %v1044 = vmul.f32 1.0, %v1043
    %v1045 = vrcp.pop %v1039
    %v1046 = vmul.f32 1.0, %v1045
    %v1047 = vrcp.pop %v1040
    %v1048 = vmul.f32 1.0, %v1047
    %v1049 = vmul.f32 %v1042, 1.0614054
    %v1050 = vmul.f32 %v1044, 1.0614054
    %v1051 = vmul.f32 %v1046, 1.0614054
    %v1052 = vmul.f32 %v1048, 1.0614054
    %v1053 = vadd.f32 %v1049, -1.4531521
    %v1054 = vadd.f32 %v1050, -1.4531521
    %v1055 = vadd.f32 %v1051, -1.4531521
    %v1056 = vadd.f32 %v1052, -1.4531521
    %v1057 = vmul.f32 %v1053, %v1042
    %v1058 = vmul.f32 %v1054, %v1044
    %v1059 = vmul.f32 %v1055, %v1046
    %v1060 = vmul.f32 %v1056, %v1048
    %v1061 = vadd.f32 %v1057, 1.4214138
    %v1062 = vadd.f32 %v1058, 1.4214138
    %v1063 = vadd.f32 %v1059, 1.4214138
    %v1064 = vadd.f32 %v1060, 1.4214138
    %v1065 = vmul.f32 %v1061, %v1042
    %v1066 = vmul.f32 %v1062, %v1044
    %v1067 = vmul.f32 %v1063, %v1046
    %v1068 = vmul.f32 %v1064, %v1048
    %v1069 = vadd.f32 %v1065, -0.28449672
    %v1070 = vadd.f32 %v1066, -0.28449672
    %v1071 = vadd.f32 %v1067, -0.28449672
    %v1072 = vadd.f32 %v1068, -0.28449672
    %v1073 = vmul.f32 %v1069, %v1042
    %v1074 = vmul.f32 %v1070, %v1044
    %v1075 = vmul.f32 %v1071, %v1046
    %v1076 = vmul.f32 %v1072, %v1048
    %v1077 = vadd.f32 %v1073, 0.2548296
    %v1078 = vadd.f32 %v1074, 0.2548296
    %v1079 = vadd.f32 %v1075, 0.2548296
    %v1080 = vadd.f32 %v1076, 0.2548296
    %v1081 = vmul.f32 %v1077, %v1042
    %v1082 = vmul.f32 %v1078, %v1044
    %v1083 = vmul.f32 %v1079, %v1046
    %v1084 = vmul.f32 %v1080, %v1048
    %v1085 = vsub.f32 0.0, %v1029
    %v1086 = vsub.f32 0.0, %v1030
    %v1087 = vsub.f32 0.0, %v1031
    %v1088 = vsub.f32 0.0, %v1032
    %v1089 = vmul.f32 %v1085, %v1029
    %v1090 = vmul.f32 %v1086, %v1030
    %v1091 = vmul.f32 %v1087, %v1031
    %v1092 = vmul.f32 %v1088, %v1032
    %v1093 = vmul.f32 %v1089, 1.442695
    %v1094 = vpow.pop %v1093
    %v1095 = vmul.f32 %v1090, 1.442695
    %v1096 = vpow.pop %v1095
    %v1097 = vmul.f32 %v1091, 1.442695
    %v1098 = vpow.pop %v1097
    %v1099 = vmul.f32 %v1092, 1.442695
    %v1100 = vpow.pop %v1099
    %v1101 = vmul.f32 %v1081, %v1094
    %v1102 = vmul.f32 %v1082, %v1096
    %v1103 = vmul.f32 %v1083, %v1098
    %v1104 = vmul.f32 %v1084, %v1100
    %v1105 = vsub.f32 1.0, %v1101
    %v1106 = vsub.f32 1.0, %v1102
    %v1107 = vsub.f32 1.0, %v1103
    %v1108 = vsub.f32 1.0, %v1104
    %vm1109 = vcmp.ge.f32.partialorder %v1025, 0.0
    %vm1110 = vcmp.ge.f32.partialorder %v1026, 0.0
    %vm1111 = vcmp.ge.f32.partialorder %v1027, 0.0
    %vm1112 = vcmp.ge.f32.partialorder %v1028, 0.0
    %v1113 = vsub.f32 0.0, %v1105
    %v1114 = vsub.f32 0.0, %v1106
    %v1115 = vsub.f32 0.0, %v1107
    %v1116 = vsub.f32 0.0, %v1108
    %v1117 = vsel %vm1109, %v1105, %v1113
    %v1118 = vsel %vm1110, %v1106, %v1114
    %v1119 = vsel %vm1111, %v1107, %v1115
    %v1120 = vsel %vm1112, %v1108, %v1116
    %v1121 = vadd.f32 %v1117, 1.0
    %v1122 = vadd.f32 %v1118, 1.0
    %v1123 = vadd.f32 %v1119, 1.0
    %v1124 = vadd.f32 %v1120, 1.0
    %v1125 = vmul.f32 %v1021, %v1121
    %v1126 = vmul.f32 %v1022, %v1122
    %v1127 = vmul.f32 %v1023, %v1123
    %v1128 = vmul.f32 %v1024, %v1124
    %v1133 = vcombine.low %v1125, %v1126
    %v1134 = vcombine.low %v1127, %v1128
    %v1137 = vadd.f32 %v40, %v1133
    %v1138 = vadd.f32 %v41, %v1134
    %v1139 = vmul.f32 %v1137, 0.7072136
    %v1140 = vmul.f32 %v1138, 0.7072136
    %1141 = vst [vmem:[#allocation5] sm:$0xff] %v1139
    %1142 = vst [vmem:[#allocation5 + $0x8] sm:$0xff] %v1140
    // Predicated region
    $region30: #{tpu_custom_call.1} parent=1 // pred_check
      _
    $region31: #{tpu_custom_call.1} parent=1 // pred_check_branch
      %1144 = sbr.rel (0) target = $region33
    $region32: #{tpu_custom_call.1} parent=1 // pred_region
      %s1146 = ssub.s32 256, 256
      %1147 = vsyncadd [#allocation4], %s1146
      %s1149 = sshll.u32 [#allocation5], 4
      %s1150 = int_to_ptr.vmem [resolvable:$true] %s1149
      %1152 = dma.vmem_to_hbm [thread:$0]  %s1150, 256, %s6, [#allocation4]
    $region33: #{tpu_custom_call.1} parent=1 // pred_fallthru
      _
    // Predicated region
    $region34: #{tpu_custom_call.1} parent=1 // pred_check
      _
    $region35: #{tpu_custom_call.1} parent=1 // pred_check_branch
      %1154 = sbr.rel (0) target = $region37
    $region36: #{tpu_custom_call.1} parent=1 // pred_region
      %1155 = dma.done [#allocation4], 256
    $region37: #{tpu_custom_call.1} parent=1 // pred_fallthru
      _
    %1156 = vsyncpa [#allocation3], 1
    %1157 = vsyncpa [#allocation4], 1

</llo_original>
